<compile_context>
chip_gen: v5e
topology: v5e:2x2
jax: 0.10.0
libtpu: 0.0.40
codegen_flags: <defaults>
</compile_context>

<pallas_src>
import jax
import jax.numpy as jnp
from jax.experimental import pallas as pl
from jax.experimental.pallas import tpu as pltpu


# --------------------------------------------------------------------------
# Fast path: decoder contraction on the MXU (requires 128 % E == 0)
# --------------------------------------------------------------------------

def _decoder_mxu_kernel(x_ref, rbd_ref, out_ref):
    # x_ref:   (TR, 128)  rows of regrouped x: each row packs g = 128//E batch
    #                     elements, each occupying E consecutive lanes
    # rbd_ref: (128, WP)  block-diagonal decoder weights
    #                     (column j holds wdec on lanes [j*E, (j+1)*E), else 0)
    # out_ref: (WP, TR)   transposed so the large (row) dim is lane-minor & dense
    t = jnp.dot(x_ref[...].astype(jnp.float32), rbd_ref[...],
                preferred_element_type=jnp.float32)          # MXU, K=128
    out_ref[...] = jnp.transpose(t)                           # tiny (TR,WP)->(WP,TR)


def _decoder_apply_mxu(x, wdec, *, x_block_bytes):
    """Returns t_vn (V, N) f32 with t_vn[v, n] = sum_e x[v, n, e] * wdec[e]."""
    V, N, E = x.shape
    g = 128 // E
    M = N // g
    R = V * M                                    # rows of the regrouped matrix
    WP = max(8, ((g + 7) // 8) * 8)              # matmul width padded to mult of 8

    # Free (contiguity-preserving) reshape: (V, N, E) -> (R, 128).
    # Row r = v*M + m holds batch elements n = m*g .. m*g + g - 1.
    x2 = jnp.reshape(x, (R, 128))

    # Block-diagonal decoder weights, zero-padded to WP columns.
    wdec_f = jnp.reshape(wdec, (E,)).astype(jnp.float32)
    lanes = jnp.arange(128)
    rbd = jnp.zeros((128, WP), jnp.float32).at[lanes, lanes // E].set(
        jnp.tile(wdec_f, g))

    # Adaptive row tile: one x tile ~= x_block_bytes (lane-aligned), full R if it fits.
    bytes_per_row = 128 * x.dtype.itemsize
    tr = x_block_bytes // bytes_per_row
    if tr >= R:
        tr = R
    else:
        tr = max(128, (tr // 128) * 128)
    grid = (pl.cdiv(R, tr),)

    # Right-sized VMEM limit: double-buffered working set + headroom, capped at 48 MiB
    # (well under physical VMEM on v5e/v6e (128 MiB) and v7x (64 MiB)).
    per_step = tr * 128 * x.dtype.itemsize + WP * tr * 4 + 128 * WP * 4
    vmem_limit = int(min(48 * 1024 * 1024, 2 * per_step + 8 * 1024 * 1024))

    t_rows = pl.pallas_call(
        _decoder_mxu_kernel,
        out_shape=jax.ShapeDtypeStruct((WP, R), jnp.float32),
        grid=grid,
        in_specs=[
            pl.BlockSpec((tr, 128), lambda i: (i, 0)),   # x rows (native layout)
            pl.BlockSpec((128, WP), lambda i: (0, 0)),   # block-diag decoder weights
        ],
        out_specs=pl.BlockSpec((WP, tr), lambda i: (0, i)),
        compiler_params=pltpu.CompilerParams(
            dimension_semantics=("parallel",),
            vmem_limit_bytes=vmem_limit,
        ),
    )(x2, rbd)

    # Decode: t_rows[j, v*M + m] = sum_e x[v, m*g + j, e] * wdec[e]
    t = jnp.reshape(t_rows[:g], (g, V, M))
    t_vn = jnp.reshape(jnp.transpose(t, (1, 2, 0)), (V, N))
    return t_vn


# --------------------------------------------------------------------------
# Fallback path: fully folded VPU kernel (any E / N) -- previously validated
# --------------------------------------------------------------------------

def _weighted_critic_vpu_kernel(x_ref, w_ref, const_ref, wdec_ref, out_ref):
    # x_ref: (V, TN, E); w_ref: (V, TN); const_ref: (1, TN); wdec_ref: (1, E)
    # out_ref: (1, TN) lane-dense output row
    x = x_ref[...].astype(jnp.float32)
    t = jnp.sum(x * wdec_ref[...], axis=2)                          # (V, TN)
    out_ref[...] = jnp.sum(t * w_ref[...], axis=0, keepdims=True) + const_ref[...]


def _weighted_critic_vpu(x, player_mask, opponent_mask, neutral_mask, params,
                         *, x_block_bytes):
    wdec, bdec, wval, bval = params
    V, N, E = x.shape

    # Fold masks + sum/mean + value_calc (torch.mean divides by the FULL V):
    #   c_k = wval[2k] + wval[2k+1] / V
    wv = jnp.reshape(wval, (6,)).astype(jnp.float32)
    c = wv[0::2] + wv[1::2] / jnp.float32(V)

    # Build the folded per-(v, n) weight map directly in (V, N) order
    # (no standalone transpose of the combined map).
    def keep(mask):
        return jnp.where(jnp.transpose(mask), 0.0, 1.0).astype(jnp.float32)

    wmap_vn = c[0] * keep(player_mask) + c[1] * keep(opponent_mask) \
        + c[2] * keep(neutral_mask)                                  # (V, N)
    const = (bdec[0].astype(jnp.float32) * jnp.sum(wmap_vn, axis=0)
             + bval[0].astype(jnp.float32))                          # (N,)
    const_r = jnp.reshape(const, (1, N))
    wdec_r = jnp.reshape(wdec, (1, E)).astype(jnp.float32)

    # Adaptive N tile targeting ~x_block_bytes per x tile.
    tn = x_block_bytes // (V * E * x.dtype.itemsize)
    if tn >= N:
        tn = N
    else:
        tn = max(128, (tn // 128) * 128)
    grid = (pl.cdiv(N, tn),)

    per_step = (V * tn * E * x.dtype.itemsize + V * tn * 4 + tn * 4
                + E * 4 + tn * 4)
    vmem_limit = int(min(48 * 1024 * 1024, 2 * per_step + 8 * 1024 * 1024))

    out_row = pl.pallas_call(
        _weighted_critic_vpu_kernel,
        out_shape=jax.ShapeDtypeStruct((1, N), jnp.float32),
        grid=grid,
        in_specs=[
            pl.BlockSpec((V, tn, E), lambda i: (0, i, 0)),   # x, native (V, N, E)
            pl.BlockSpec((V, tn), lambda i: (0, i)),         # folded weight map
            pl.BlockSpec((1, tn), lambda i: (0, i)),         # per-n constant
            pl.BlockSpec((1, E), lambda i: (0, 0)),          # decoder weight row
        ],
        out_specs=pl.BlockSpec((1, tn), lambda i: (0, i)),
        compiler_params=pltpu.CompilerParams(
            dimension_semantics=("parallel",),
            vmem_limit_bytes=vmem_limit,
        ),
    )(x, wmap_vn, const_r, wdec_r)

    return jnp.reshape(out_row, (N, 1))


# --------------------------------------------------------------------------
# Public wrapper
# --------------------------------------------------------------------------

def weighted_critic(x, player_mask, opponent_mask, neutral_mask, params,
                    *, x_block_bytes=4 * 1024 * 1024, path="auto"):
    """x: (V, N, E) float (sequence-first, as in the PyTorch forward).
    masks: (N, V) bool.  params = (wdec (1,E), bdec (1,), wval (1,6), bval (1,)).
    Returns (N, 1) float32, matching WeightedCritic.forward."""
    wdec, bdec, wval, bval = params
    V, N, E = x.shape

    use_mxu = (path == "mxu") or (
        path == "auto" and 1 <= E <= 128 and 128 % E == 0 and N % (128 // E) == 0)
    if not use_mxu:
        return _weighted_critic_vpu(x, player_mask, opponent_mask, neutral_mask,
                                    params, x_block_bytes=x_block_bytes)

    # Heavy O(N*V*E) decoder contraction on the MXU (single pass over x).
    t_vn = _decoder_apply_mxu(x, wdec, x_block_bytes=x_block_bytes)

    # Tiny O(N*V) epilogue in XLA -- exact masked_fill semantics via jnp.where.
    iv = t_vn + bdec[0].astype(jnp.float32)                         # (V, N)
    wv = jnp.reshape(wval, (6,)).astype(jnp.float32)

    def masked_sum(mask):                                           # mask: (N, V)
        return jnp.sum(jnp.where(jnp.transpose(mask), 0.0, iv), axis=0)   # (N,)

    s_p = masked_sum(player_mask)
    s_o = masked_sum(opponent_mask)
    s_n = masked_sum(neutral_mask)
    inv_v = 1.0 / jnp.float32(V)                  # torch.mean divides by full V
    out = (wv[0] * s_p + wv[1] * s_p * inv_v
           + wv[2] * s_o + wv[3] * s_o * inv_v
           + wv[4] * s_n + wv[5] * s_n * inv_v
           + bval[0].astype(jnp.float32))
    return jnp.reshape(out, (N, 1))


def reference(x, pm, om, nm, params):
    """Pure-JAX mirror of the PyTorch forward."""
    wdec, bdec, wval, bval = params
    xr = jnp.transpose(x, (1, 0, 2))                               # (N, V, E)
    iv = jnp.squeeze(xr @ jnp.transpose(wdec) + bdec, axis=-1)     # (N, V)
    V = iv.shape[1]
    cols = []
    for mask in (pm, om, nm):
        filled = jnp.where(mask, 0.0, iv)
        cols.append(jnp.sum(filled, axis=1))
        cols.append(jnp.sum(filled, axis=1) / V)                   # mean over full V
    wvals = jnp.stack(cols, axis=1)                                # (N, 6)
    return wvals @ jnp.transpose(wval) + bval                      # (N, 1)


if __name__ == "__main__":
    key = jax.random.PRNGKey(0)
    ks = jax.random.split(key, 9)

    # ---- case 1: MXU fast path (128 % E == 0), multi-step grid ----
    V, N, E = 8, 512, 32
    wdec = jax.random.normal(ks[0], (1, E), jnp.float32) / jnp.sqrt(E)
    bdec = jnp.full((1,), 0.1, jnp.float32)
    wval = jax.random.normal(ks[1], (1, 6), jnp.float32) / jnp.sqrt(6.0)
    bval = jnp.full((1,), -0.05, jnp.float32)
    params = (wdec, bdec, wval, bval)

    x = jax.random.normal(ks[2], (V, N, E), jnp.float32)
    pm = jax.random.bernoulli(ks[3], 0.3, (N, V))
    om = jax.random.bernoulli(ks[4], 0.3, (N, V))
    nm = jnp.logical_not(jnp.logical_or(pm, om))

    out = weighted_critic(x, pm, om, nm, params,
                          x_block_bytes=64 * 1024)   # small tile -> 8-step grid
    out = jax.block_until_ready(out)
    ref = reference(x, pm, om, nm, params)
    assert out.shape == (N, 1)
    assert jnp.allclose(out, ref, atol=1e-4, rtol=1e-4), \
        float(jnp.max(jnp.abs(out - ref)))

    # ---- case 2: general-shape VPU fallback path (128 % E != 0) ----
    V2, N2, E2 = 8, 256, 24
    wdec2 = jax.random.normal(ks[5], (1, E2), jnp.float32) / jnp.sqrt(E2)
    params2 = (wdec2, bdec, wval, bval)
    x2 = jax.random.normal(ks[6], (V2, N2, E2), jnp.float32)
    pm2 = jax.random.bernoulli(ks[7], 0.3, (N2, V2))
    om2 = jax.random.bernoulli(ks[8], 0.3, (N2, V2))
    nm2 = jnp.logical_not(jnp.logical_or(pm2, om2))

    out2 = weighted_critic(x2, pm2, om2, nm2, params2,
                           x_block_bytes=96 * 1024)  # forces a 2-step grid
    out2 = jax.block_until_ready(out2)
    ref2 = reference(x2, pm2, om2, nm2, params2)
    assert out2.shape == (N2, 1)
    assert jnp.allclose(out2, ref2, atol=1e-4, rtol=1e-4), \
        float(jnp.max(jnp.abs(out2 - ref2)))

    print("KERNEL_OK")
</pallas_src>

<mosaic_0001>
module attributes {stable_mosaic.version = 11 : i64} {
  func.func @_decoder_mxu_kernel(%arg0: i32, %arg1: memref<128x128xf32, #tpu.memory_space<vmem>>, %arg2: memref<128x8xf32, #tpu.memory_space<vmem>>, %arg3: memref<8x128xf32, #tpu.memory_space<vmem>>) attributes {dimension_semantics = [#tpu.dimension_semantics<parallel>], iteration_bounds = array<i64: 8>, scalar_prefetch = 0 : i64, scratch_operands = 0 : i64, tpu.core_type = #tpu.core_type<tc>, window_params = [{transform_indices = @transform_0, window_bounds = array<i64: 128, 128>}, {pipeline_mode = #tpu.pipeline_mode<synchronous>, transform_indices = @transform_1, window_bounds = array<i64: 128, 8>}, {transform_indices = @transform_2, window_bounds = array<i64: 8, 128>}]} {
    %c0 = arith.constant 0 : index
    %c0_0 = arith.constant 0 : index
    %0 = vector.load %arg1[%c0, %c0_0] : memref<128x128xf32, #tpu.memory_space<vmem>>, vector<128x128xf32>
    %c0_1 = arith.constant 0 : index
    %c0_2 = arith.constant 0 : index
    %1 = vector.load %arg2[%c0_1, %c0_2] : memref<128x8xf32, #tpu.memory_space<vmem>>, vector<128x8xf32>
    %cst = arith.constant dense<0.000000e+00> : vector<128x8xf32>
    %2 = tpu.matmul %0, %1, %cst {dimension_numbers = #tpu.dot_dimension_numbers<[1], [0], [0], [1], [0, 0, 1, 1], [], []>} : vector<128x128xf32>, vector<128x8xf32>, vector<128x8xf32> -> vector<128x8xf32>
    %3 = tpu.transpose %2, [1, 0] : vector<128x8xf32> -> vector<8x128xf32>
    %c0_3 = arith.constant 0 : index
    %c0_4 = arith.constant 0 : index
    %4 = vector.load %arg3[%c0_3, %c0_4] : memref<8x128xf32, #tpu.memory_space<vmem>>, vector<8x128xf32>
    tpu.vector_store %arg3[%c0_3, %c0_4], %3 {strides = array<i32>} : memref<8x128xf32, #tpu.memory_space<vmem>>, vector<8x128xf32>,
    return
  }
  func.func @transform_0(%arg0: i32) -> (i32, i32) {
    %c0_i32 = arith.constant 0 : i32
    %c0_i32_0 = arith.constant 0 : i32
    return %arg0, %c0_i32 : i32, i32
  }
  func.func @transform_1(%arg0: i32) -> (i32, i32) {
    %c0_i32 = arith.constant 0 : i32
    %c0_i32_0 = arith.constant 0 : i32
    %c0_i32_1 = arith.constant 0 : i32
    return %c0_i32, %c0_i32_0 : i32, i32
  }
  func.func @transform_2(%arg0: i32) -> (i32, i32) {
    %c0_i32 = arith.constant 0 : i32
    %c0_i32_0 = arith.constant 0 : i32
    return %c0_i32, %arg0 : i32, i32
  }
}

</mosaic_0001>

<llo_original>
// kernel: tpu_custom_call.1
$region0: #{tpu_custom_call.1}
  #allocation0 [shape = 'u32[]', space=smem, size = 0x4, offset = 0x4, fixed_abs, tag = 'smem constant byte address 0x4 - core index']
  #allocation1 [shape = 'u32[72,128]{1,0:T(1,128)}', space=vmem, size = 0x9000, scoped, tag = 'internal scratch']
  %s0 = inlined_call_operand.hbm [shape: f32[1024,128], index: 0, kind: input, shape index: {}]
  %s1 = inlined_call_operand.vmem [shape: f32[128,8], index: 1, kind: input, shape index: {}]
  %s2 = inlined_call_operand.hbm [shape: f32[8,1024], index: 2, kind: output, shape index: {}]
  %s3 = sld [smem:[#allocation0]]
  $region45: #{tpu_custom_call.1} parent=0
    _
  %s5 = ssub.s32 1, %s3
  %s6 = scalar_select 0, %s5, %s3
  $region1: #{tpu_custom_call.1} parent=0
    #allocation2 [shape = 'u8[131072]{0}', space=vmem, size = 0x20000, scoped, tag = 'input window, operand 0']
    #allocation3 [shape = 's32[2]{0}', space=sflag, size = 0x8, scoped, tag = 'scoped memory for tpu_custom_call.1']
    #allocation4 [shape = 's32[2]{0}', space=sflag, size = 0x8, scoped, tag = 'scoped memory for tpu_custom_call.1']
    #allocation5 [shape = 'u8[8192]{0}', space=vmem, size = 0x2000, scoped, tag = 'output window, operand 0']
    %7 = vsyncpa [#allocation3], 0
    %s8 = scalar_lea.sflag [#allocation3], 1
    %9 = vsyncpa %s8, 0
    %10 = vsyncpa [#allocation4], 0
    %s11 = scalar_lea.sflag [#allocation4], 1
    %12 = vsyncpa %s11, 0
    loop: start=0, step=1, limit=10
    $region2: #{tpu_custom_call.1} parent=1 // loop_pre_header
      _
    $region3: #{tpu_custom_call.1} parent=1 // loop_header
      %s14 = sphi 0, %s18
      %p15 = scmp.ge.s32.totalorder %s14, 10
      %s24 = sphi 0, %s26
      %s27 = sphi 0, %s24
      %s28 = sphi 0, %s27
      %s44 = sphi 0, %s28
      %s48 = sphi 0, %s48
      %s50 = sphi 0, %s48
      %s51 = sphi 0, %s50
      %s65 = sphi 0, %s51
      %s71 = sphi 0, %s73
      %s74 = sphi 0, %s71
      %s75 = sphi 0, %s74
      %s91 = sphi 0, %s75
    $region4: #{tpu_custom_call.1} parent=1 // loop_header_branch
      %17 = sbr.rel (%p15) target = $region8
    $region5: #{tpu_custom_call.1} parent=1 // loop_body
      %s19 = ssub.s32 %s14, 1
      %s20 = ssub.s32 %s14, 2
      %s21 = sadd.s32 %s14, 1
      %s22 = ssub.s32 %s14, %s21
      %p23 = scmp.eq.s32.totalorder %s22, 0
      %s25 = sadd.s32 %s24, 1
      %s26 = scalar_select %p23, %s24, %s25
      %p29 = pneg %p23
      %p30 = scmp.eq.s32.totalorder %s14, 7
      %p31 = por %p29, %p30
      %p32 = scmp.ne.s32.totalorder %s24, %s27
      %p33 = scmp.eq.s32.totalorder %s14, 0
      %p34 = por %p32, %p33
      %p35 = scmp.ne.s32.totalorder %s24, %s27
      %p36 = scmp.eq.s32.totalorder %s19, 7
      %p37 = por %p35, %p36
      %p38 = scmp.ne.s32.totalorder %s27, %s28
      %p39 = scmp.eq.s32.totalorder %s19, 0
      %p40 = por %p38, %p39
      %p41 = scmp.ne.s32.totalorder %s27, %s28
      %p42 = scmp.eq.s32.totalorder %s20, 7
      %p43 = por %p41, %p42
      %p45 = scmp.ne.s32.totalorder %s28, %s44
      %p46 = scmp.eq.s32.totalorder %s20, 0
      %p47 = por %p45, %p46
      %s49 = sadd.s32 %s48, 1
      %p52 = scmp.eq.s32.totalorder %s14, 7
      %p53 = scmp.ne.s32.totalorder %s48, %s50
      %p54 = scmp.eq.s32.totalorder %s14, 0
      %p55 = por %p53, %p54
      %p56 = scmp.ne.s32.totalorder %s48, %s50
      %p57 = scmp.eq.s32.totalorder %s19, 7
      %p58 = por %p56, %p57
      %p59 = scmp.ne.s32.totalorder %s50, %s51
      %p60 = scmp.eq.s32.totalorder %s19, 0
      %p61 = por %p59, %p60
      %p62 = scmp.ne.s32.totalorder %s50, %s51
      %p63 = scmp.eq.s32.totalorder %s20, 7
      %p64 = por %p62, %p63
      %p66 = scmp.ne.s32.totalorder %s51, %s65
      %p67 = scmp.eq.s32.totalorder %s20, 0
      %p68 = por %p66, %p67
      %s69 = ssub.s32 %s14, %s21
      %p70 = scmp.eq.s32.totalorder %s69, 0
      %s72 = sadd.s32 %s71, 1
      %s73 = scalar_select %p70, %s71, %s72
      %p76 = pneg %p70
      %p77 = scmp.eq.s32.totalorder %s14, 7
      %p78 = por %p76, %p77
      %p79 = scmp.ne.s32.totalorder %s71, %s74
      %p80 = scmp.eq.s32.totalorder %s14, 0
      %p81 = por %p79, %p80
      %p82 = scmp.ne.s32.totalorder %s71, %s74
      %p83 = scmp.eq.s32.totalorder %s19, 7
      %p84 = por %p82, %p83
      %p85 = scmp.ne.s32.totalorder %s74, %s75
      %p86 = scmp.eq.s32.totalorder %s19, 0
      %p87 = por %p85, %p86
      %p88 = scmp.ne.s32.totalorder %s74, %s75
      %p89 = scmp.eq.s32.totalorder %s20, 7
      %p90 = por %p88, %p89
      %p92 = scmp.ne.s32.totalorder %s75, %s91
      %p93 = scmp.eq.s32.totalorder %s20, 0
      %p94 = por %p92, %p93
      %p95 = scmp.le.s32.totalorder 1, %s14
      %p96 = scmp.lt.s32.totalorder %s14, 9
      %p97 = pnand %p95, %p96
      %p98 = pneg %p97
      // Predicated region
      $region9: #{tpu_custom_call.1} parent=5 // pred_check
        _
      $region10: #{tpu_custom_call.1} parent=5 // pred_check_branch
        %100 = sbr.rel (%p97) target = $region12
      $region11: #{tpu_custom_call.1} parent=5 // pred_region
        %s101 = ssub.s32 %s14, 1
        // Predicated region
        $region13: #{tpu_custom_call.1} parent=11 // pred_check
          %p102 = pneg %p61
        $region14: #{tpu_custom_call.1} parent=11 // pred_check_branch
          %104 = sbr.rel (%p102) target = $region16
        $region15: #{tpu_custom_call.1} parent=11 // pred_region
          _
        $region16: #{tpu_custom_call.1} parent=11 // pred_fallthru
          _
      $region12: #{tpu_custom_call.1} parent=5 // pred_fallthru
        _
      %p105 = scmp.lt.s32.totalorder %s14, 8
      // Predicated region
      $region17: #{tpu_custom_call.1} parent=5 // pred_check
        %p106 = pneg %p105
      $region18: #{tpu_custom_call.1} parent=5 // pred_check_branch
        %108 = sbr.rel (%p106) target = $region20
      $region19: #{tpu_custom_call.1} parent=5 // pred_region
        // Predicated region
        $region21: #{tpu_custom_call.1} parent=19 // pred_check
          %p109 = pneg %p34
        $region22: #{tpu_custom_call.1} parent=19 // pred_check_branch
          %111 = sbr.rel (%p109) target = $region24
        $region23: #{tpu_custom_call.1} parent=19 // pred_region
          %s112 = sand.u32 %s24, 1
          %s113 = scalar_lea.sflag [#allocation3], %s112
          %s114 = sand.u32 %s24, 1
          %s115 = smul.addr %s114, 128
          %s116 = scalar_lea.vmem [#allocation2], %s115
          %s117 = smul.u32 16, %s14
          %119 = vsyncadd %s113, 0
          %s120 = smul.addr %s117, 8
          %s121 = scalar_lea.hbm %s0, %s120
          %s122 = sshll.u32 %s121, 4
          %s123 = int_to_ptr.hbm [resolvable:$true] %s122
          %s124 = sshll.u32 %s116, 4
          %s125 = int_to_ptr.vmem [resolvable:$true] %s124
          %130 = dma.hbm_to_vmem [thread:$0]  %s123, 2048, %s125, %s113, 128, 128, 8
        $region24: #{tpu_custom_call.1} parent=19 // pred_fallthru
          _
      $region20: #{tpu_custom_call.1} parent=5 // pred_fallthru
        _
      %p131 = scmp.le.s32.totalorder 1, %s14
      %p132 = scmp.lt.s32.totalorder %s14, 9
      %p133 = pnand %p131, %p132
      %p134 = pneg %p133
      // Predicated region
      $region25: #{tpu_custom_call.1} parent=5 // pred_check
        _
      $region26: #{tpu_custom_call.1} parent=5 // pred_check_branch
        %136 = sbr.rel (%p133) target = $region28
      $region27: #{tpu_custom_call.1} parent=5 // pred_region
        %s137 = ssub.s32 %s14, 1
        %s138 = sand.u32 %s27, 1
        %s139 = scalar_lea.sflag [#allocation3], %s138
        %s140 = sand.u32 %s27, 1
        %s141 = smul.addr %s140, 128
        %s142 = scalar_lea.vmem [#allocation2], %s141
        // Predicated region
        $region29: #{tpu_custom_call.1} parent=27 // pred_check
          %p143 = pneg %p40
        $region30: #{tpu_custom_call.1} parent=27 // pred_check_branch
          %145 = sbr.rel (%p143) target = $region32
        $region31: #{tpu_custom_call.1} parent=27 // pred_region
          %147 = dma.done %s139, 2048
        $region32: #{tpu_custom_call.1} parent=27 // pred_fallthru
          _
        %s148 = sand.u32 %s27, 1
        %s149 = scalar_lea.sflag [#allocation3], %s148
        %s150 = sand.u32 %s27, 1
        %s151 = smul.addr %s150, 128
        %s152 = scalar_lea.vmem [#allocation2], %s151
        %p153 = pneg %p40
        %p154 = pneg %p37
        %p155 = pneg %p61
        %p156 = pneg %p58
        %p157 = pneg %p87
        %p158 = pneg %p84
        %s159 = sand.u32 %s74, 1
        %s160 = scalar_lea.sflag [#allocation4], %s159
        %s161 = sand.u32 %s74, 1
        %s162 = smul.addr %s161, 8
        %s163 = scalar_lea.vmem [#allocation5], %s162
        %s164 = smul.u32 16, %s19
        %v165 = vld [vmem:[%s142] sm:$0xff]
        %v166 = vld [vmem:[%s142 + $0x8] sm:$0xff]
        %v167 = vld [vmem:[%s142 + $0x10] sm:$0xff]
        %v168 = vld [vmem:[%s142 + $0x18] sm:$0xff]
        %v169 = vld [vmem:[%s142 + $0x20] sm:$0xff]
        %v170 = vld [vmem:[%s142 + $0x28] sm:$0xff]
        %v171 = vld [vmem:[%s142 + $0x30] sm:$0xff]
        %v172 = vld [vmem:[%s142 + $0x38] sm:$0xff]
        %v173 = vld [vmem:[%s142 + $0x40] sm:$0xff]
        %v174 = vld [vmem:[%s142 + $0x48] sm:$0xff]
        %v175 = vld [vmem:[%s142 + $0x50] sm:$0xff]
        %v176 = vld [vmem:[%s142 + $0x58] sm:$0xff]
        %v177 = vld [vmem:[%s142 + $0x60] sm:$0xff]
        %v178 = vld [vmem:[%s142 + $0x68] sm:$0xff]
        %v179 = vld [vmem:[%s142 + $0x70] sm:$0xff]
        %v180 = vld [vmem:[%s142 + $0x78] sm:$0xff]
        %v181 = vld [vmem:[%s1] sm:$0xff]
        %v182 = vld [vmem:[%s1 + $0x8] sm:$0xff]
        %v183 = vld [vmem:[%s1 + $0x10] sm:$0xff]
        %v184 = vld [vmem:[%s1 + $0x18] sm:$0xff]
        %v185 = vld [vmem:[%s1 + $0x20] sm:$0xff]
        %v186 = vld [vmem:[%s1 + $0x28] sm:$0xff]
        %v187 = vld [vmem:[%s1 + $0x30] sm:$0xff]
        %v188 = vld [vmem:[%s1 + $0x38] sm:$0xff]
        %v189 = vld [vmem:[%s1 + $0x40] sm:$0xff]
        %v190 = vld [vmem:[%s1 + $0x48] sm:$0xff]
        %v191 = vld [vmem:[%s1 + $0x50] sm:$0xff]
        %v192 = vld [vmem:[%s1 + $0x58] sm:$0xff]
        %v193 = vld [vmem:[%s1 + $0x60] sm:$0xff]
        %v194 = vld [vmem:[%s1 + $0x68] sm:$0xff]
        %v195 = vld [vmem:[%s1 + $0x70] sm:$0xff]
        %v196 = vld [vmem:[%s1 + $0x78] sm:$0xff]
        %197 = vmatpush.msra.mxu0 %v196
        %198 = vmatpush.msra.mxu0 %v195
        %199 = vmatpush.msra.mxu0 %v194
        %200 = vmatpush.msra.mxu0 %v193
        %201 = vmatpush.msra.mxu0 %v192
        %202 = vmatpush.msra.mxu0 %v191
        %203 = vmatpush.msra.mxu0 %v190
        %204 = vmatpush.msra.mxu0 %v189
        %205 = vmatpush.msra.mxu0 %v188
        %206 = vmatpush.msra.mxu0 %v187
        %207 = vmatpush.msra.mxu0 %v186
        %208 = vmatpush.msra.mxu0 %v185
        %209 = vmatpush.msra.mxu0 %v184
        %210 = vmatpush.msra.mxu0 %v183
        %211 = vmatpush.msra.mxu0 %v182
        %212 = vmatpush.msra.mxu0 %v181
        %213 = vmatmul.f32.gmra.mxu0 %v165
        %v214 = vpop.f32.mrf.mxu0
        %v215 = vadd.f32 0.0, %v214
        %216 = vmatmul.f32.gmra.mxu0 %v166
        %v217 = vpop.f32.mrf.mxu0
        %v218 = vadd.f32 0.0, %v217
        %219 = vmatmul.f32.gmra.mxu0 %v167
        %v220 = vpop.f32.mrf.mxu0
        %v221 = vadd.f32 0.0, %v220
        %222 = vmatmul.f32.gmra.mxu0 %v168
        %v223 = vpop.f32.mrf.mxu0
        %v224 = vadd.f32 0.0, %v223
        %225 = vmatmul.f32.gmra.mxu0 %v169
        %v226 = vpop.f32.mrf.mxu0
        %v227 = vadd.f32 0.0, %v226
        %228 = vmatmul.f32.gmra.mxu0 %v170
        %v229 = vpop.f32.mrf.mxu0
        %v230 = vadd.f32 0.0, %v229
        %231 = vmatmul.f32.gmra.mxu0 %v171
        %v232 = vpop.f32.mrf.mxu0
        %v233 = vadd.f32 0.0, %v232
        %234 = vmatmul.f32.gmra.mxu0 %v172
        %v235 = vpop.f32.mrf.mxu0
        %v236 = vadd.f32 0.0, %v235
        %237 = vmatmul.f32.gmra.mxu0 %v173
        %v238 = vpop.f32.mrf.mxu0
        %v239 = vadd.f32 0.0, %v238
        %240 = vmatmul.f32.gmra.mxu0 %v174
        %v241 = vpop.f32.mrf.mxu0
        %v242 = vadd.f32 0.0, %v241
        %243 = vmatmul.f32.gmra.mxu0 %v175
        %v244 = vpop.f32.mrf.mxu0
        %v245 = vadd.f32 0.0, %v244
        %246 = vmatmul.f32.gmra.mxu0 %v176
        %v247 = vpop.f32.mrf.mxu0
        %v248 = vadd.f32 0.0, %v247
        %249 = vmatmul.f32.gmra.mxu0 %v177
        %v250 = vpop.f32.mrf.mxu0
        %v251 = vadd.f32 0.0, %v250
        %252 = vmatmul.f32.gmra.mxu0 %v178
        %v253 = vpop.f32.mrf.mxu0
        %v254 = vadd.f32 0.0, %v253
        %255 = vmatmul.f32.gmra.mxu0 %v179
        %v256 = vpop.f32.mrf.mxu0
        %v257 = vadd.f32 0.0, %v256
        %258 = vmatmul.f32.gmra.mxu0 %v180
        %v259 = vpop.f32.mrf.mxu0
        %v260 = vadd.f32 0.0, %v259
        %261 = vdwg.mxu0
        %262 = vxpose.xlu0.b32.start [1/16] %v215, 128
        %263 = vxpose.xlu0.b32.cont [2/16] %v218, 128
        %264 = vxpose.xlu0.b32.cont [3/16] %v221, 128
        %265 = vxpose.xlu0.b32.cont [4/16] %v224, 128
        %266 = vxpose.xlu0.b32.cont [5/16] %v227, 128
        %267 = vxpose.xlu0.b32.cont [6/16] %v230, 128
        %268 = vxpose.xlu0.b32.cont [7/16] %v233, 128
        %269 = vxpose.xlu0.b32.cont [8/16] %v236, 128
        %270 = vxpose.xlu0.b32.cont [9/16] %v239, 128
        %271 = vxpose.xlu0.b32.cont [10/16] %v242, 128
        %272 = vxpose.xlu0.b32.cont [11/16] %v245, 128
        %273 = vxpose.xlu0.b32.cont [12/16] %v248, 128
        %274 = vxpose.xlu0.b32.cont [13/16] %v251, 128
        %275 = vxpose.xlu0.b32.cont [14/16] %v254, 128
        %276 = vxpose.xlu0.b32.cont [15/16] %v257, 128
        %277 = vxpose.xlu0.b32.end [16/16] %v260, 128
        %v278 = vpop.trf.xlu0
        %v279 = vpop.trf.xlu0
        %v280 = vpop.trf.xlu0
        %v281 = vpop.trf.xlu0
        %v282 = vpop.trf.xlu0
        %v283 = vpop.trf.xlu0
        %v284 = vpop.trf.xlu0
        %v285 = vpop.trf.xlu0
        %v286 = vpop.trf.xlu0
        %v287 = vpop.trf.xlu0
        %v288 = vpop.trf.xlu0
        %v289 = vpop.trf.xlu0
        %v290 = vpop.trf.xlu0
        %v291 = vpop.trf.xlu0
        %v292 = vpop.trf.xlu0
        %v293 = vpop.trf.xlu0
        %294 = vst [vmem:[%s163] sm:$0xff] %v278
        %s295 = sand.u32 %s74, 1
        %s296 = scalar_lea.sflag [#allocation4], %s295
        %s297 = sand.u32 %s74, 1
        %s298 = smul.addr %s297, 8
        %s299 = scalar_lea.vmem [#allocation5], %s298
        // Predicated region
        $region33: #{tpu_custom_call.1} parent=27 // pred_check
          %p300 = pneg %p84
        $region34: #{tpu_custom_call.1} parent=27 // pred_check_branch
          %302 = sbr.rel (%p300) target = $region36
        $region35: #{tpu_custom_call.1} parent=27 // pred_region
          %304 = vsyncadd %s296, 0
          %s305 = smul.addr %s19, 8
          %s306 = scalar_lea.hbm %s2, %s305
          %s308 = sshll.u32 %s299, 4
          %s309 = int_to_ptr.vmem [resolvable:$true] %s308
          %s310 = sshll.u32 %s306, 4
          %s311 = int_to_ptr.hbm [resolvable:$true] %s310
          %313 = dma.vmem_to_hbm [thread:$0]  %s309, 128, %s311, %s296
        $region36: #{tpu_custom_call.1} parent=27 // pred_fallthru
          _
      $region28: #{tpu_custom_call.1} parent=5 // pred_fallthru
        _
      %p314 = scmp.le.s32.totalorder 2, %s14
      // Predicated region
      $region37: #{tpu_custom_call.1} parent=5 // pred_check
        %p315 = pneg %p314
      $region38: #{tpu_custom_call.1} parent=5 // pred_check_branch
        %317 = sbr.rel (%p315) target = $region40
      $region39: #{tpu_custom_call.1} parent=5 // pred_region
        %s318 = ssub.s32 %s14, 2
        // Predicated region
        $region41: #{tpu_custom_call.1} parent=39 // pred_check
          %p319 = pneg %p90
        $region42: #{tpu_custom_call.1} parent=39 // pred_check_branch
          %321 = sbr.rel (%p319) target = $region44
        $region43: #{tpu_custom_call.1} parent=39 // pred_region
          %s322 = sand.u32 %s75, 1
          %s323 = scalar_lea.sflag [#allocation4], %s322
          %s324 = sand.u32 %s75, 1
          %s325 = smul.addr %s324, 8
          %s326 = scalar_lea.vmem [#allocation5], %s325
          %328 = dma.done %s323, 128
        $region44: #{tpu_custom_call.1} parent=39 // pred_fallthru
          _
      $region40: #{tpu_custom_call.1} parent=5 // pred_fallthru
        _
    $region6: #{tpu_custom_call.1} parent=1 // loop_footer
      %s18 = sadd.s32 1, %s14
    $region7: #{tpu_custom_call.1} parent=1 // loop_footer_branch
      %13 = sbr.rel target = $region3
    $region8: #{tpu_custom_call.1} parent=1 // loop_exit
      _
    %329 = vsyncpa [#allocation3], 1
    %s330 = scalar_lea.sflag [#allocation3], 1
    %331 = vsyncpa %s330, 1
    %332 = vsyncpa [#allocation4], 1
    %s333 = scalar_lea.sflag [#allocation4], 1
    %334 = vsyncpa %s333, 1

</llo_original>
